<compile_context>
chip_gen: v7x
topology: tpu7x:2x2x1
jax: 0.10.0
libtpu: 0.0.40
codegen_flags: <defaults>
</compile_context>

<pallas_src>
import jax
import jax.numpy as jnp
from jax.experimental import pallas as pl
from jax.experimental.pallas import tpu as pltpu

INPUT_SIZE = 132
HIDDEN_DIMS = (256, 128)
NUM_CLASSES = 82
BN_EPS = 1e-5

OUT_PAD = 128          # output head padded 82 -> 128 (lane-dense unmasked stores)
TB_MAX = 4096          # max batch-tile rows per grid step
_TB_BUCKETS = (8, 16, 32, 64, 128, 256, 512, 1024, 2048, 4096)


def _round_up(n, m):
    return (n + m - 1) // m * m


def _choose_tb(padded_batch):
    """Pick the batch-tile size (multiple of 8, bucketed).

    For batches >= 256 the target is ~half the batch so the grid has at least
    two steps and the "parallel" axis shards across both TensorCores on v7x.
    """
    if padded_batch <= 128:
        target = padded_batch
    else:
        target = min(TB_MAX, _round_up(pl.cdiv(padded_batch, 2), 8))
    for bucket in _TB_BUCKETS:
        if target <= bucket:
            return min(bucket, padded_batch)
    return TB_MAX


def mlp_kernel(x_ref, w1_ref, b1_ref, w2_ref, b2_ref, w3_ref, b3_ref, o_ref):
    """One batch tile of the fused 3-layer MLP (BN folded, dropout = id)."""
    x = x_ref[...]                                                   # (tb, 132) f32

    # Layer 1: Linear (BN folded) -> ReLU.  Ragged K=132 handled by Mosaic.
    h1 = jnp.dot(x, w1_ref[...], preferred_element_type=jnp.float32) + b1_ref[...]
    h1 = jnp.maximum(h1, 0.0)

    # Layer 2: Linear (BN folded) -> ReLU.
    h2 = jnp.dot(h1, w2_ref[...], preferred_element_type=jnp.float32) + b2_ref[...]
    h2 = jnp.maximum(h2, 0.0)

    # Output head (columns 82..127 are zero-padded weights/bias).
    out = jnp.dot(h2, w3_ref[...], preferred_element_type=jnp.float32) + b3_ref[...]
    o_ref[...] = out.astype(o_ref.dtype)


def init_params(key):
    """PyTorch-default init (uniform(+-1/sqrt(in)) for Linear; BN gamma=1,
    beta=0, running stats 0/1), then BN-fold and pad only the output head."""
    dims = (INPUT_SIZE,) + HIDDEN_DIMS + (NUM_CLASSES,)
    keys = jax.random.split(key, 2 * (len(dims) - 1))
    raw = {}
    for li in range(len(dims) - 1):
        in_dim, out_dim = dims[li], dims[li + 1]
        bound = 1.0 / jnp.sqrt(in_dim)
        w = jax.random.uniform(keys[2 * li], (in_dim, out_dim),
                               minval=-bound, maxval=bound, dtype=jnp.float32)
        b = jax.random.uniform(keys[2 * li + 1], (1, out_dim),
                               minval=-bound, maxval=bound, dtype=jnp.float32)
        raw[f"w{li + 1}"] = w
        raw[f"b{li + 1}"] = b

    # Fold eval-mode BatchNorm into the hidden-layer Linear weights/bias.
    for li, out_dim in enumerate(HIDDEN_DIMS, start=1):
        gamma = jnp.ones((1, out_dim), jnp.float32)
        beta = jnp.zeros((1, out_dim), jnp.float32)
        running_mean = jnp.zeros((1, out_dim), jnp.float32)
        running_var = jnp.ones((1, out_dim), jnp.float32)
        scale = gamma / jnp.sqrt(running_var + BN_EPS)
        shift = beta - running_mean * scale
        raw[f"w{li}"] = raw[f"w{li}"] * scale           # column-wise
        raw[f"b{li}"] = raw[f"b{li}"] * scale + shift

    # Pad only the output head to a lane-dense 128 columns.
    w3 = jnp.zeros((HIDDEN_DIMS[1], OUT_PAD), jnp.float32)
    w3 = w3.at[:, :NUM_CLASSES].set(raw["w3"])
    b3 = jnp.zeros((1, OUT_PAD), jnp.float32)
    b3 = b3.at[:, :NUM_CLASSES].set(raw["b3"])

    return {
        "w1": raw["w1"], "b1": raw["b1"],    # (132, 256) unpadded
        "w2": raw["w2"], "b2": raw["b2"],    # (256, 128)
        "w3": w3, "b3": b3,                  # (128, 128) / (1, 128)
    }


def _mlp_pallas(xb, params):
    """Pallas forward on an (padded_batch, 132) f32 input; returns the
    (padded_batch, OUT_PAD) f32 slab."""
    padded_batch = xb.shape[0]
    tb = _choose_tb(padded_batch)
    grid = (pl.cdiv(padded_batch, tb),)

    h1, h2 = HIDDEN_DIMS
    weight_bytes = (INPUT_SIZE * h1 + h1 * h2 + h2 * OUT_PAD) * 4
    bias_bytes = (h1 + h2 + OUT_PAD) * 4
    io_bytes = padded_batch * (INPUT_SIZE + OUT_PAD) * 4
    cost = pl.CostEstimate(
        flops=2 * padded_batch * (INPUT_SIZE * h1 + h1 * h2 + h2 * OUT_PAD),
        transcendentals=0,
        bytes_accessed=weight_bytes + bias_bytes + io_bytes,
    )

    return pl.pallas_call(
        mlp_kernel,
        out_shape=jax.ShapeDtypeStruct((padded_batch, OUT_PAD), jnp.float32),
        grid=grid,
        in_specs=[
            pl.BlockSpec((tb, INPUT_SIZE), lambda i: (i, 0)),      # x tile (no K pad)
            pl.BlockSpec((INPUT_SIZE, h1), lambda i: (0, 0)),      # w1 (VMEM-resident)
            pl.BlockSpec((1, h1), lambda i: (0, 0)),               # b1
            pl.BlockSpec((h1, h2), lambda i: (0, 0)),              # w2
            pl.BlockSpec((1, h2), lambda i: (0, 0)),               # b2
            pl.BlockSpec((h2, OUT_PAD), lambda i: (0, 0)),         # w3
            pl.BlockSpec((1, OUT_PAD), lambda i: (0, 0)),          # b3
        ],
        out_specs=pl.BlockSpec((tb, OUT_PAD), lambda i: (i, 0)),
        compiler_params=pltpu.CompilerParams(
            dimension_semantics=("parallel",),
            vmem_limit_bytes=32 * 1024 * 1024,
        ),
        cost_estimate=cost,
    )(xb, params["w1"], params["b1"], params["w2"], params["b2"],
      params["w3"], params["b3"])


@jax.jit
def net_forward_padded(x, params):
    """Returns the (round_up(batch, 8), 128) output slab.  Rows >= batch and
    columns >= 82 are padding; downstream consumers that can ignore them skip
    the extra HBM slice pass of `net_forward`."""
    batch = x.shape[0]
    padded_batch = _round_up(batch, 8)
    xb = x if padded_batch == batch else jnp.pad(x, ((0, padded_batch - batch), (0, 0)))
    return _mlp_pallas(xb, params)


@jax.jit
def net_forward(x, params):
    """Exact module semantics: returns (batch, 82)."""
    batch = x.shape[0]
    return net_forward_padded(x, params)[:batch, :NUM_CLASSES]


def net_forward_ref(x, params):
    """Pure-JAX f32 reference of the eval-mode forward (BN already folded)."""
    hp = jax.lax.Precision.HIGHEST
    h = jnp.dot(x, params["w1"], precision=hp) + params["b1"]
    h = jnp.maximum(h, 0.0)
    h = jnp.dot(h, params["w2"], precision=hp) + params["b2"]
    h = jnp.maximum(h, 0.0)
    out = jnp.dot(h, params["w3"], precision=hp) + params["b3"]
    return out[:, :NUM_CLASSES]


if __name__ == "__main__":
    key = jax.random.PRNGKey(0)
    k_params, k_x1, k_x2 = jax.random.split(key, 3)

    params = init_params(k_params)

    # Small-batch case (single grid step, tb = 16).
    batch = 16
    x = jax.random.normal(k_x1, (batch, INPUT_SIZE), dtype=jnp.float32)
    out = jax.block_until_ready(net_forward(x, params))
    ref = net_forward_ref(x, params)
    assert out.shape == (batch, NUM_CLASSES), out.shape
    assert jnp.allclose(out, ref, atol=2e-2, rtol=2e-2), "mismatch vs reference (batch=16)"

    # Multi-tile case exercising batch padding (260 -> 264) and a 2-step grid.
    batch2 = 260
    x2 = jax.random.normal(k_x2, (batch2, INPUT_SIZE), dtype=jnp.float32)
    out2 = jax.block_until_ready(net_forward(x2, params))
    ref2 = net_forward_ref(x2, params)
    assert out2.shape == (batch2, NUM_CLASSES), out2.shape
    assert jnp.allclose(out2, ref2, atol=2e-2, rtol=2e-2), "mismatch vs reference (batch=260)"

    print("KERNEL_OK")
</pallas_src>

<mosaic_0001>
module attributes {stable_mosaic.version = 11 : i64} {
  func.func @mlp_kernel(%arg0: i32, %arg1: memref<16x132xf32, #tpu.memory_space<vmem>>, %arg2: memref<132x256xf32, #tpu.memory_space<vmem>>, %arg3: memref<1x256xf32, #tpu.memory_space<vmem>>, %arg4: memref<256x128xf32, #tpu.memory_space<vmem>>, %arg5: memref<1x128xf32, #tpu.memory_space<vmem>>, %arg6: memref<128x128xf32, #tpu.memory_space<vmem>>, %arg7: memref<1x128xf32, #tpu.memory_space<vmem>>, %arg8: memref<16x128xf32, #tpu.memory_space<vmem>>) attributes {dimension_semantics = [#tpu.dimension_semantics<parallel>], iteration_bounds = array<i64: 1>, scalar_prefetch = 0 : i64, scratch_operands = 0 : i64, tpu.core_type = #tpu.core_type<tc>, window_params = [{transform_indices = @transform_0, window_bounds = array<i64: 16, 132>}, {pipeline_mode = #tpu.pipeline_mode<synchronous>, transform_indices = @transform_1, window_bounds = array<i64: 132, 256>}, {pipeline_mode = #tpu.pipeline_mode<synchronous>, transform_indices = @transform_2, window_bounds = array<i64: 1, 256>}, {pipeline_mode = #tpu.pipeline_mode<synchronous>, transform_indices = @transform_3, window_bounds = array<i64: 256, 128>}, {pipeline_mode = #tpu.pipeline_mode<synchronous>, transform_indices = @transform_4, window_bounds = array<i64: 1, 128>}, {pipeline_mode = #tpu.pipeline_mode<synchronous>, transform_indices = @transform_5, window_bounds = array<i64: 128, 128>}, {pipeline_mode = #tpu.pipeline_mode<synchronous>, transform_indices = @transform_6, window_bounds = array<i64: 1, 128>}, {transform_indices = @transform_7, window_bounds = array<i64: 16, 128>}]} {
    %c0 = arith.constant 0 : index
    %c0_0 = arith.constant 0 : index
    %0 = vector.load %arg1[%c0, %c0_0] : memref<16x132xf32, #tpu.memory_space<vmem>>, vector<16x132xf32>
    %c0_1 = arith.constant 0 : index
    %c0_2 = arith.constant 0 : index
    %1 = vector.load %arg2[%c0_1, %c0_2] : memref<132x256xf32, #tpu.memory_space<vmem>>, vector<132x256xf32>
    %cst = arith.constant dense<0.000000e+00> : vector<16x256xf32>
    %2 = tpu.matmul %0, %1, %cst {dimension_numbers = #tpu.dot_dimension_numbers<[1], [0], [0], [1], [0, 0, 1, 1], [], []>} : vector<16x132xf32>, vector<132x256xf32>, vector<16x256xf32> -> vector<16x256xf32>
    %c0_3 = arith.constant 0 : index
    %c0_4 = arith.constant 0 : index
    %3 = vector.load %arg3[%c0_3, %c0_4] : memref<1x256xf32, #tpu.memory_space<vmem>>, vector<1x256xf32>
    %4 = vector.broadcast %3 : vector<1x256xf32> to vector<16x256xf32>
    %5 = arith.addf %2, %4 : vector<16x256xf32>
    %cst_5 = arith.constant 0.000000e+00 : f32
    %6 = vector.broadcast %cst_5 : f32 to vector<16x256xf32>
    %7 = arith.maximumf %5, %6 : vector<16x256xf32>
    %c0_6 = arith.constant 0 : index
    %c0_7 = arith.constant 0 : index
    %8 = vector.load %arg4[%c0_6, %c0_7] : memref<256x128xf32, #tpu.memory_space<vmem>>, vector<256x128xf32>
    %cst_8 = arith.constant dense<0.000000e+00> : vector<16x128xf32>
    %9 = tpu.matmul %7, %8, %cst_8 {dimension_numbers = #tpu.dot_dimension_numbers<[1], [0], [0], [1], [0, 0, 1, 1], [], []>} : vector<16x256xf32>, vector<256x128xf32>, vector<16x128xf32> -> vector<16x128xf32>
    %c0_9 = arith.constant 0 : index
    %c0_10 = arith.constant 0 : index
    %10 = vector.load %arg5[%c0_9, %c0_10] : memref<1x128xf32, #tpu.memory_space<vmem>>, vector<1x128xf32>
    %11 = vector.broadcast %10 : vector<1x128xf32> to vector<16x128xf32>
    %12 = arith.addf %9, %11 : vector<16x128xf32>
    %cst_11 = arith.constant 0.000000e+00 : f32
    %13 = vector.broadcast %cst_11 : f32 to vector<16x128xf32>
    %14 = arith.maximumf %12, %13 : vector<16x128xf32>
    %c0_12 = arith.constant 0 : index
    %c0_13 = arith.constant 0 : index
    %15 = vector.load %arg6[%c0_12, %c0_13] : memref<128x128xf32, #tpu.memory_space<vmem>>, vector<128x128xf32>
    %cst_14 = arith.constant dense<0.000000e+00> : vector<16x128xf32>
    %16 = tpu.matmul %14, %15, %cst_14 {dimension_numbers = #tpu.dot_dimension_numbers<[1], [0], [0], [1], [0, 0, 1, 1], [], []>} : vector<16x128xf32>, vector<128x128xf32>, vector<16x128xf32> -> vector<16x128xf32>
    %c0_15 = arith.constant 0 : index
    %c0_16 = arith.constant 0 : index
    %17 = vector.load %arg7[%c0_15, %c0_16] : memref<1x128xf32, #tpu.memory_space<vmem>>, vector<1x128xf32>
    %18 = vector.broadcast %17 : vector<1x128xf32> to vector<16x128xf32>
    %19 = arith.addf %16, %18 : vector<16x128xf32>
    %c0_17 = arith.constant 0 : index
    %c0_18 = arith.constant 0 : index
    %20 = vector.load %arg8[%c0_17, %c0_18] : memref<16x128xf32, #tpu.memory_space<vmem>>, vector<16x128xf32>
    tpu.vector_store %arg8[%c0_17, %c0_18], %19 {strides = array<i32>} : memref<16x128xf32, #tpu.memory_space<vmem>>, vector<16x128xf32>,
    return
  }
  func.func @transform_0(%arg0: i32) -> (i32, i32) {
    %c0_i32 = arith.constant 0 : i32
    %c0_i32_0 = arith.constant 0 : i32
    return %arg0, %c0_i32 : i32, i32
  }
  func.func @transform_1(%arg0: i32) -> (i32, i32) {
    %c0_i32 = arith.constant 0 : i32
    %c0_i32_0 = arith.constant 0 : i32
    %c0_i32_1 = arith.constant 0 : i32
    return %c0_i32, %c0_i32_0 : i32, i32
  }
  func.func @transform_2(%arg0: i32) -> (i32, i32) {
    %c0_i32 = arith.constant 0 : i32
    %c0_i32_0 = arith.constant 0 : i32
    %c0_i32_1 = arith.constant 0 : i32
    return %c0_i32, %c0_i32_0 : i32, i32
  }
  func.func @transform_3(%arg0: i32) -> (i32, i32) {
    %c0_i32 = arith.constant 0 : i32
    %c0_i32_0 = arith.constant 0 : i32
    %c0_i32_1 = arith.constant 0 : i32
    return %c0_i32, %c0_i32_0 : i32, i32
  }
  func.func @transform_4(%arg0: i32) -> (i32, i32) {
    %c0_i32 = arith.constant 0 : i32
    %c0_i32_0 = arith.constant 0 : i32
    %c0_i32_1 = arith.constant 0 : i32
    return %c0_i32, %c0_i32_0 : i32, i32
  }
  func.func @transform_5(%arg0: i32) -> (i32, i32) {
    %c0_i32 = arith.constant 0 : i32
    %c0_i32_0 = arith.constant 0 : i32
    %c0_i32_1 = arith.constant 0 : i32
    return %c0_i32, %c0_i32_0 : i32, i32
  }
  func.func @transform_6(%arg0: i32) -> (i32, i32) {
    %c0_i32 = arith.constant 0 : i32
    %c0_i32_0 = arith.constant 0 : i32
    %c0_i32_1 = arith.constant 0 : i32
    return %c0_i32, %c0_i32_0 : i32, i32
  }
  func.func @transform_7(%arg0: i32) -> (i32, i32) {
    %c0_i32 = arith.constant 0 : i32
    %c0_i32_0 = arith.constant 0 : i32
    return %arg0, %c0_i32 : i32, i32
  }
}

</mosaic_0001>

<llo_original>
// kernel: net_forward_padded.1
$region0: #{net_forward_padded.1}
  #allocation0 [shape = 'u32[]', space=smem, size = 0x4, offset = 0x4, fixed_abs, tag = 'smem constant byte address 0x4 - core index']
  #allocation1 [shape = 'u32[144,128]{1,0:T(1,128)}', space=vmem, size = 0x12000, scoped, tag = 'internal scratch']
  %s0 = inlined_call_operand.hbm [shape: f32[16,132], index: 0, kind: input, shape index: {}]
  %s1 = inlined_call_operand.hbm [shape: f32[132,256], index: 1, kind: input, shape index: {}]
  %s2 = inlined_call_operand.vmem [shape: f32[1,256], index: 2, kind: input, shape index: {}]
  %s3 = inlined_call_operand.hbm [shape: f32[256,128], index: 3, kind: input, shape index: {}]
  %s4 = inlined_call_operand.vmem [shape: f32[1,128], index: 4, kind: input, shape index: {}]
  %s5 = inlined_call_operand.hbm [shape: f32[128,128], index: 5, kind: input, shape index: {}]
  %s6 = inlined_call_operand.vmem [shape: f32[1,128], index: 6, kind: input, shape index: {}]
  %s7 = inlined_call_operand.hbm [shape: f32[16,128], index: 7, kind: output, shape index: {}]
  %s8 = sld [smem:[#allocation0]]
  $region54: #{net_forward_padded.1} parent=0
    _
  %s10 = ssub.s32 1, %s8
  %s11 = scalar_select 0, %s10, %s8
  $region1: #{net_forward_padded.1} parent=0
    #allocation2 [shape = 'u8[16384]{0}', space=vmem, size = 0x4000, scoped, tag = 'input window, operand 0, single buffered']
    #allocation3 [shape = 's32[1]{0}', space=sflag, size = 0x4, scoped, tag = 'scoped memory for net_forward_padded.1']
    #allocation4 [shape = 's32[1]{0}', space=sflag, size = 0x4, scoped, tag = 'scoped memory for net_forward_padded.1']
    #allocation5 [shape = 'u8[139264]{0}', space=vmem, size = 0x22000, scoped, tag = 'input window, operand 1, single buffered']
    #allocation6 [shape = 's32[1]{0}', space=sflag, size = 0x4, scoped, tag = 'scoped memory for net_forward_padded.1']
    #allocation7 [shape = 'u8[131072]{0}', space=vmem, size = 0x20000, scoped, tag = 'input window, operand 3, single buffered']
    #allocation8 [shape = 'u8[65536]{0}', space=vmem, size = 0x10000, scoped, tag = 'input window, operand 5, single buffered']
    #allocation9 [shape = 's32[1]{0}', space=sflag, size = 0x4, scoped, tag = 'scoped memory for net_forward_padded.1']
    #allocation10 [shape = 'u8[8192]{0}', space=vmem, size = 0x2000, scoped, tag = 'output window, operand 0, single buffered']
    %12 = vsyncpa [#allocation3], 0
    %13 = vsyncpa [#allocation6], 0
    %14 = vsyncpa [#allocation9], 0
    %15 = vsyncpa [#allocation4], 0
    // Predicated region
    $region2: #{net_forward_padded.1} parent=1 // pred_check
      _
    $region3: #{net_forward_padded.1} parent=1 // pred_check_branch
      %17 = sbr.rel (0) target = $region5
    $region4: #{net_forward_padded.1} parent=1 // pred_region
      %s19 = ssub.s32 512, 512
      %20 = vsyncadd [#allocation3], %s19
      %s21 = sshll.u32 [#allocation2], 4
      %s22 = int_to_ptr.vmem [resolvable:$true] %s21
      %27 = dma.hbm_to_vmem [thread:$0]  %s0, 512, %s22, [#allocation3], 256, 256, 16
    $region5: #{net_forward_padded.1} parent=1 // pred_fallthru
      _
    // Predicated region
    $region6: #{net_forward_padded.1} parent=1 // pred_check
      _
    $region7: #{net_forward_padded.1} parent=1 // pred_check_branch
      %29 = sbr.rel (0) target = $region9
    $region8: #{net_forward_padded.1} parent=1 // pred_region
      %s31 = ssub.s32 4352, 4352
      %32 = vsyncadd [#allocation6], %s31
      %s33 = sshll.u32 [#allocation5], 4
      %s34 = int_to_ptr.vmem [resolvable:$true] %s33
      %39 = dma.hbm_to_vmem [thread:$0]  %s1, 4352, %s34, [#allocation6], 256, 256, 16
    $region9: #{net_forward_padded.1} parent=1 // pred_fallthru
      _
    // Predicated region
    $region10: #{net_forward_padded.1} parent=1 // pred_check
      _
    $region11: #{net_forward_padded.1} parent=1 // pred_check_branch
      %41 = sbr.rel (0) target = $region13
    $region12: #{net_forward_padded.1} parent=1 // pred_region
      _
    $region13: #{net_forward_padded.1} parent=1 // pred_fallthru
      _
    // Predicated region
    $region14: #{net_forward_padded.1} parent=1 // pred_check
      _
    $region15: #{net_forward_padded.1} parent=1 // pred_check_branch
      %43 = sbr.rel (0) target = $region17
    $region16: #{net_forward_padded.1} parent=1 // pred_region
      %s45 = ssub.s32 4096, 4096
      %46 = vsyncadd [#allocation6], %s45
      %s47 = sshll.u32 [#allocation7], 4
      %s48 = int_to_ptr.vmem [resolvable:$true] %s47
      %53 = dma.hbm_to_vmem [thread:$0]  %s3, 4096, %s48, [#allocation6], 128, 128, 8
    $region17: #{net_forward_padded.1} parent=1 // pred_fallthru
      _
    // Predicated region
    $region18: #{net_forward_padded.1} parent=1 // pred_check
      _
    $region19: #{net_forward_padded.1} parent=1 // pred_check_branch
      %55 = sbr.rel (0) target = $region21
    $region20: #{net_forward_padded.1} parent=1 // pred_region
      _
    $region21: #{net_forward_padded.1} parent=1 // pred_fallthru
      _
    // Predicated region
    $region22: #{net_forward_padded.1} parent=1 // pred_check
      _
    $region23: #{net_forward_padded.1} parent=1 // pred_check_branch
      %57 = sbr.rel (0) target = $region25
    $region24: #{net_forward_padded.1} parent=1 // pred_region
      %s59 = ssub.s32 2048, 2048
      %60 = vsyncadd [#allocation9], %s59
      %s61 = sshll.u32 [#allocation8], 4
      %s62 = int_to_ptr.vmem [resolvable:$true] %s61
      %67 = dma.hbm_to_vmem [thread:$0]  %s5, 2048, %s62, [#allocation9], 128, 128, 8
    $region25: #{net_forward_padded.1} parent=1 // pred_fallthru
      _
    // Predicated region
    $region26: #{net_forward_padded.1} parent=1 // pred_check
      _
    $region27: #{net_forward_padded.1} parent=1 // pred_check_branch
      %69 = sbr.rel (0) target = $region29
    $region28: #{net_forward_padded.1} parent=1 // pred_region
      _
    $region29: #{net_forward_padded.1} parent=1 // pred_fallthru
      _
    // Predicated region
    $region30: #{net_forward_padded.1} parent=1 // pred_check
      _
    $region31: #{net_forward_padded.1} parent=1 // pred_check_branch
      %71 = sbr.rel (0) target = $region33
    $region32: #{net_forward_padded.1} parent=1 // pred_region
      %72 = dma.done [#allocation3], 512
    $region33: #{net_forward_padded.1} parent=1 // pred_fallthru
      _
    // Predicated region
    $region34: #{net_forward_padded.1} parent=1 // pred_check
      _
    $region35: #{net_forward_padded.1} parent=1 // pred_check_branch
      %74 = sbr.rel (0) target = $region37
    $region36: #{net_forward_padded.1} parent=1 // pred_region
      %75 = dma.done [#allocation6], 4352
    $region37: #{net_forward_padded.1} parent=1 // pred_fallthru
      _
    // Predicated region
    $region38: #{net_forward_padded.1} parent=1 // pred_check
      _
    $region39: #{net_forward_padded.1} parent=1 // pred_check_branch
      %77 = sbr.rel (0) target = $region41
    $region40: #{net_forward_padded.1} parent=1 // pred_region
      %78 = dma.done [#allocation6], 4096
    $region41: #{net_forward_padded.1} parent=1 // pred_fallthru
      _
    // Predicated region
    $region42: #{net_forward_padded.1} parent=1 // pred_check
      _
    $region43: #{net_forward_padded.1} parent=1 // pred_check_branch
      %80 = sbr.rel (0) target = $region45
    $region44: #{net_forward_padded.1} parent=1 // pred_region
      %81 = dma.done [#allocation9], 2048
    $region45: #{net_forward_padded.1} parent=1 // pred_fallthru
      _
    %v82 = vld [vmem:[#allocation2] sm:$0xff]
    %v83 = vld [vmem:[#allocation2 + $0x8] sm:$0xff]
    %v84 = vld [vmem:[#allocation2 + $0x10] sm:$0xff]
    %v85 = vld [vmem:[#allocation2 + $0x18] sm:$0xff]
    %v86 = vld [vmem:[#allocation5] sm:$0xff]
    %v87 = vld [vmem:[#allocation5 + $0x8] sm:$0xff]
    %v88 = vld [vmem:[#allocation5 + $0x10] sm:$0xff]
    %v89 = vld [vmem:[#allocation5 + $0x18] sm:$0xff]
    %v90 = vld [vmem:[#allocation5 + $0x20] sm:$0xff]
    %v91 = vld [vmem:[#allocation5 + $0x28] sm:$0xff]
    %v92 = vld [vmem:[#allocation5 + $0x30] sm:$0xff]
    %v93 = vld [vmem:[#allocation5 + $0x38] sm:$0xff]
    %v94 = vld [vmem:[#allocation5 + $0x40] sm:$0xff]
    %v95 = vld [vmem:[#allocation5 + $0x48] sm:$0xff]
    %v96 = vld [vmem:[#allocation5 + $0x50] sm:$0xff]
    %v97 = vld [vmem:[#allocation5 + $0x58] sm:$0xff]
    %v98 = vld [vmem:[#allocation5 + $0x60] sm:$0xff]
    %v99 = vld [vmem:[#allocation5 + $0x68] sm:$0xff]
    %v100 = vld [vmem:[#allocation5 + $0x70] sm:$0xff]
    %v101 = vld [vmem:[#allocation5 + $0x78] sm:$0xff]
    %v102 = vld [vmem:[#allocation5 + $0x80] sm:$0xff]
    %v103 = vld [vmem:[#allocation5 + $0x88] sm:$0xff]
    %v104 = vld [vmem:[#allocation5 + $0x90] sm:$0xff]
    %v105 = vld [vmem:[#allocation5 + $0x98] sm:$0xff]
    %v106 = vld [vmem:[#allocation5 + $0xa0] sm:$0xff]
    %v107 = vld [vmem:[#allocation5 + $0xa8] sm:$0xff]
    %v108 = vld [vmem:[#allocation5 + $0xb0] sm:$0xff]
    %v109 = vld [vmem:[#allocation5 + $0xb8] sm:$0xff]
    %v110 = vld [vmem:[#allocation5 + $0xc0] sm:$0xff]
    %v111 = vld [vmem:[#allocation5 + $0xc8] sm:$0xff]
    %v112 = vld [vmem:[#allocation5 + $0xd0] sm:$0xff]
    %v113 = vld [vmem:[#allocation5 + $0xd8] sm:$0xff]
    %v114 = vld [vmem:[#allocation5 + $0xe0] sm:$0xff]
    %v115 = vld [vmem:[#allocation5 + $0xe8] sm:$0xff]
    %v116 = vld [vmem:[#allocation5 + $0xf0] sm:$0xff]
    %v117 = vld [vmem:[#allocation5 + $0xf8] sm:$0xff]
    %v118 = vld [vmem:[#allocation5 + $0x100] sm:$0xf]
    %v119 = vld [vmem:[#allocation5 + $0x108] sm:$0xf]
    %v120 = vld [vmem:[%s2] sm:$0x3]
    %v122 = vlaneseq
    %v123 = vshrl.u32 %v122, 7
    %v124 = vsub.s32 0, %v123
    %v125 = vrot.slane %v120, %v124
    %v126 = vlaneseq
    %v127 = vshrl.u32 %v126, 7
    %v128 = vsub.s32 1, %v127
    %v129 = vrot.slane %v120, %v128
    %vm132 = vcmask 31744
    %v134 = vsel %vm132, %v83, 0
    %v137 = vsel %vm132, %v85, 0
    %vm139 = vcmask 1043456
    %v141 = vsel %vm139, %v118, 0
    %v144 = vsel %vm139, %v119, 0
    %146 = vmatprep.subr.mxu0 %v87
    %147 = vmatpush1.msra.mxu0 %v86
    %148 = vmatprep.subr.mxu0 %v89
    %149 = vmatpush1.msra.mxu0 %v88
    %150 = vmatprep.subr.mxu0 %v91
    %151 = vmatpush1.msra.mxu0 %v90
    %152 = vmatprep.subr.mxu0 %v93
    %153 = vmatpush1.msra.mxu0 %v92
    %154 = vmatprep.subr.mxu0 %v95
    %155 = vmatpush1.msra.mxu0 %v94
    %156 = vmatprep.subr.mxu0 %v97
    %157 = vmatpush1.msra.mxu0 %v96
    %158 = vmatprep.subr.mxu0 %v99
    %159 = vmatpush1.msra.mxu0 %v98
    %160 = vmatprep.subr.mxu0 %v101
    %161 = vmatpush1.msra.mxu0 %v100
    %162 = vmatprep.subr.mxu0 %v103
    %163 = vmatpush1.msra.mxu0 %v102
    %164 = vmatprep.subr.mxu0 %v105
    %165 = vmatpush1.msra.mxu0 %v104
    %166 = vmatprep.subr.mxu0 %v107
    %167 = vmatpush1.msra.mxu0 %v106
    %168 = vmatprep.subr.mxu0 %v109
    %169 = vmatpush1.msra.mxu0 %v108
    %170 = vmatprep.subr.mxu0 %v111
    %171 = vmatpush1.msra.mxu0 %v110
    %172 = vmatprep.subr.mxu0 %v113
    %173 = vmatpush1.msra.mxu0 %v112
    %174 = vmatprep.subr.mxu0 %v115
    %175 = vmatpush1.msra.mxu0 %v114
    %176 = vmatprep.subr.mxu0 %v117
    %177 = vmatpush1.msra.mxu0 %v116
    %178 = vmatprep.subr.mxu0 %v144
    %179 = vmatpush1.msra.mxu0 %v141
    %180 = vmatprep.subr.mxu0 0.0
    %181 = vmatpush1.msra.mxu0 0.0
    %182 = vmatprep.subr.mxu0 0.0
    %183 = vmatpush1.msra.mxu0 0.0
    %184 = vmatprep.subr.mxu0 0.0
    %185 = vmatpush1.msra.mxu0 0.0
    %186 = vmatprep.subr.mxu0 0.0
    %187 = vmatpush1.msra.mxu0 0.0
    %188 = vmatprep.subr.mxu0 0.0
    %189 = vmatpush1.msra.mxu0 0.0
    %190 = vmatprep.subr.mxu0 0.0
    %191 = vmatpush1.msra.mxu0 0.0
    %192 = vmatprep.subr.mxu0 0.0
    %193 = vmatpush1.msra.mxu0 0.0
    %194 = vmatprep.subr.mxu0 0.0
    %195 = vmatpush1.msra.mxu0 0.0
    %196 = vmatprep.subr.mxu0 0.0
    %197 = vmatpush1.msra.mxu0 0.0
    %198 = vmatprep.subr.mxu0 0.0
    %199 = vmatpush1.msra.mxu0 0.0
    %200 = vmatprep.subr.mxu0 0.0
    %201 = vmatpush1.msra.mxu0 0.0
    %202 = vmatprep.subr.mxu0 0.0
    %203 = vmatpush1.msra.mxu0 0.0
    %204 = vmatprep.subr.mxu0 0.0
    %205 = vmatpush1.msra.mxu0 0.0
    %206 = vmatprep.subr.mxu0 0.0
    %207 = vmatpush1.msra.mxu0 0.0
    %208 = vmatprep.subr.mxu0 0.0
    %209 = vmatpush1.msra.mxu0 0.0
    %210 = vmatprep.mubr.f32.mxu0 %v134
    %211 = vmatmul.mubr.f32.gmra.mrb[0].mxu0 %v82
    %v212 = vpop.f32.mrb[0].mxu0
    %v213 = vadd.f32 %v125, %v212
    %v214 = vpop.f32.mrb[0].mxu0
    %v215 = vadd.f32 %v129, %v214
    %216 = vmatprep.mubr.f32.mxu0 %v137
    %217 = vmatmul.mubr.f32.gmra.mrb[0].mxu0 %v84
    %v218 = vpop.f32.mrb[0].mxu0
    %v219 = vadd.f32 %v125, %v218
    %v220 = vpop.f32.mrb[0].mxu0
    %v221 = vadd.f32 %v129, %v220
    %222 = vdwg.mxu0
    %v223 = vmax.f32 %v213, 0.0
    %v224 = vmax.f32 %v215, 0.0
    %v225 = vmax.f32 %v219, 0.0
    %v226 = vmax.f32 %v221, 0.0
    %v227 = vld [vmem:[#allocation7] sm:$0xff]
    %v228 = vld [vmem:[#allocation7 + $0x8] sm:$0xff]
    %v229 = vld [vmem:[#allocation7 + $0x10] sm:$0xff]
    %v230 = vld [vmem:[#allocation7 + $0x18] sm:$0xff]
    %v231 = vld [vmem:[#allocation7 + $0x20] sm:$0xff]
    %v232 = vld [vmem:[#allocation7 + $0x28] sm:$0xff]
    %v233 = vld [vmem:[#allocation7 + $0x30] sm:$0xff]
    %v234 = vld [vmem:[#allocation7 + $0x38] sm:$0xff]
    %v235 = vld [vmem:[#allocation7 + $0x40] sm:$0xff]
    %v236 = vld [vmem:[#allocation7 + $0x48] sm:$0xff]
    %v237 = vld [vmem:[#allocation7 + $0x50] sm:$0xff]
    %v238 = vld [vmem:[#allocation7 + $0x58] sm:$0xff]
    %v239 = vld [vmem:[#allocation7 + $0x60] sm:$0xff]
    %v240 = vld [vmem:[#allocation7 + $0x68] sm:$0xff]
    %v241 = vld [vmem:[#allocation7 + $0x70] sm:$0xff]
    %v242 = vld [vmem:[#allocation7 + $0x78] sm:$0xff]
    %v243 = vld [vmem:[#allocation7 + $0x80] sm:$0xff]
    %v244 = vld [vmem:[#allocation7 + $0x88] sm:$0xff]
    %v245 = vld [vmem:[#allocation7 + $0x90] sm:$0xff]
    %v246 = vld [vmem:[#allocation7 + $0x98] sm:$0xff]
    %v247 = vld [vmem:[#allocation7 + $0xa0] sm:$0xff]
    %v248 = vld [vmem:[#allocation7 + $0xa8] sm:$0xff]
    %v249 = vld [vmem:[#allocation7 + $0xb0] sm:$0xff]
    %v250 = vld [vmem:[#allocation7 + $0xb8] sm:$0xff]
    %v251 = vld [vmem:[#allocation7 + $0xc0] sm:$0xff]
    %v252 = vld [vmem:[#allocation7 + $0xc8] sm:$0xff]
    %v253 = vld [vmem:[#allocation7 + $0xd0] sm:$0xff]
    %v254 = vld [vmem:[#allocation7 + $0xd8] sm:$0xff]
    %v255 = vld [vmem:[#allocation7 + $0xe0] sm:$0xff]
    %v256 = vld [vmem:[#allocation7 + $0xe8] sm:$0xff]
    %v257 = vld [vmem:[#allocation7 + $0xf0] sm:$0xff]
    %v258 = vld [vmem:[#allocation7 + $0xf8] sm:$0xff]
    %v259 = vld [vmem:[%s4] sm:$0x1]
    %v261 = vlaneseq
    %v262 = vshrl.u32 %v261, 7
    %v263 = vsub.s32 0, %v262
    %v264 = vrot.slane %v259, %v263
    %266 = vmatprep.subr.mxu0 0.0
    %267 = vmatpush1.msra.mxu0 %v227
    %268 = vmatprep.subr.mxu0 0.0
    %269 = vmatpush1.msra.mxu0 %v228
    %270 = vmatprep.subr.mxu0 0.0
    %271 = vmatpush1.msra.mxu0 %v229
    %272 = vmatprep.subr.mxu0 0.0
    %273 = vmatpush1.msra.mxu0 %v230
    %274 = vmatprep.subr.mxu0 0.0
    %275 = vmatpush1.msra.mxu0 %v231
    %276 = vmatprep.subr.mxu0 0.0
    %277 = vmatpush1.msra.mxu0 %v232
    %278 = vmatprep.subr.mxu0 0.0
    %279 = vmatpush1.msra.mxu0 %v233
    %280 = vmatprep.subr.mxu0 0.0
    %281 = vmatpush1.msra.mxu0 %v234
    %282 = vmatprep.subr.mxu0 0.0
    %283 = vmatpush1.msra.mxu0 %v235
    %284 = vmatprep.subr.mxu0 0.0
    %285 = vmatpush1.msra.mxu0 %v236
    %286 = vmatprep.subr.mxu0 0.0
    %287 = vmatpush1.msra.mxu0 %v237
    %288 = vmatprep.subr.mxu0 0.0
    %289 = vmatpush1.msra.mxu0 %v238
    %290 = vmatprep.subr.mxu0 0.0
    %291 = vmatpush1.msra.mxu0 %v239
    %292 = vmatprep.subr.mxu0 0.0
    %293 = vmatpush1.msra.mxu0 %v240
    %294 = vmatprep.subr.mxu0 0.0
    %295 = vmatpush1.msra.mxu0 %v241
    %296 = vmatprep.subr.mxu0 0.0
    %297 = vmatpush1.msra.mxu0 %v242
    %298 = vmatprep.subr.mxu0 0.0
    %299 = vmatpush1.msra.mxu0 %v243
    %300 = vmatprep.subr.mxu0 0.0
    %301 = vmatpush1.msra.mxu0 %v244
    %302 = vmatprep.subr.mxu0 0.0
    %303 = vmatpush1.msra.mxu0 %v245
    %304 = vmatprep.subr.mxu0 0.0
    %305 = vmatpush1.msra.mxu0 %v246
    %306 = vmatprep.subr.mxu0 0.0
    %307 = vmatpush1.msra.mxu0 %v247
    %308 = vmatprep.subr.mxu0 0.0
    %309 = vmatpush1.msra.mxu0 %v248
    %310 = vmatprep.subr.mxu0 0.0
    %311 = vmatpush1.msra.mxu0 %v249
    %312 = vmatprep.subr.mxu0 0.0
    %313 = vmatpush1.msra.mxu0 %v250
    %314 = vmatprep.subr.mxu0 0.0
    %315 = vmatpush1.msra.mxu0 %v251
    %316 = vmatprep.subr.mxu0 0.0
    %317 = vmatpush1.msra.mxu0 %v252
    %318 = vmatprep.subr.mxu0 0.0
    %319 = vmatpush1.msra.mxu0 %v253
    %320 = vmatprep.subr.mxu0 0.0
    %321 = vmatpush1.msra.mxu0 %v254
    %322 = vmatprep.subr.mxu0 0.0
    %323 = vmatpush1.msra.mxu0 %v255
    %324 = vmatprep.subr.mxu0 0.0
    %325 = vmatpush1.msra.mxu0 %v256
    %326 = vmatprep.subr.mxu0 0.0
    %327 = vmatpush1.msra.mxu0 %v257
    %328 = vmatprep.subr.mxu0 0.0
    %329 = vmatpush1.msra.mxu0 %v258
    %330 = vmatprep.mubr.f32.mxu0 %v224
    %331 = vmatmul.mubr.f32.gmra.mrb[0].mxu0 %v223
    %v332 = vpop.f32.mrb[0].mxu0
    %v333 = vadd.f32 %v264, %v332
    %v334 = vpop.f32.mrb[0].mxu0
    %335 = vmatprep.mubr.f32.mxu0 %v226
    %336 = vmatmul.mubr.f32.gmra.mrb[0].mxu0 %v225
    %v337 = vpop.f32.mrb[0].mxu0
    %v338 = vadd.f32 %v264, %v337
    %v339 = vpop.f32.mrb[0].mxu0
    %340 = vdwg.mxu0
    %v341 = vmax.f32 %v333, 0.0
    %v342 = vmax.f32 %v338, 0.0
    %v343 = vld [vmem:[#allocation8] sm:$0xff]
    %v344 = vld [vmem:[#allocation8 + $0x8] sm:$0xff]
    %v345 = vld [vmem:[#allocation8 + $0x10] sm:$0xff]
    %v346 = vld [vmem:[#allocation8 + $0x18] sm:$0xff]
    %v347 = vld [vmem:[#allocation8 + $0x20] sm:$0xff]
    %v348 = vld [vmem:[#allocation8 + $0x28] sm:$0xff]
    %v349 = vld [vmem:[#allocation8 + $0x30] sm:$0xff]
    %v350 = vld [vmem:[#allocation8 + $0x38] sm:$0xff]
    %v351 = vld [vmem:[#allocation8 + $0x40] sm:$0xff]
    %v352 = vld [vmem:[#allocation8 + $0x48] sm:$0xff]
    %v353 = vld [vmem:[#allocation8 + $0x50] sm:$0xff]
    %v354 = vld [vmem:[#allocation8 + $0x58] sm:$0xff]
    %v355 = vld [vmem:[#allocation8 + $0x60] sm:$0xff]
    %v356 = vld [vmem:[#allocation8 + $0x68] sm:$0xff]
    %v357 = vld [vmem:[#allocation8 + $0x70] sm:$0xff]
    %v358 = vld [vmem:[#allocation8 + $0x78] sm:$0xff]
    %v359 = vld [vmem:[%s6] sm:$0x1]
    %v361 = vlaneseq
    %v362 = vshrl.u32 %v361, 7
    %v363 = vsub.s32 0, %v362
    %v364 = vrot.slane %v359, %v363
    %366 = vmatprep.subr.mxu0 0.0
    %367 = vmatpush1.msra.mxu0 %v343
    %368 = vmatprep.subr.mxu0 0.0
    %369 = vmatpush1.msra.mxu0 %v344
    %370 = vmatprep.subr.mxu0 0.0
    %371 = vmatpush1.msra.mxu0 %v345
    %372 = vmatprep.subr.mxu0 0.0
    %373 = vmatpush1.msra.mxu0 %v346
    %374 = vmatprep.subr.mxu0 0.0
    %375 = vmatpush1.msra.mxu0 %v347
    %376 = vmatprep.subr.mxu0 0.0
    %377 = vmatpush1.msra.mxu0 %v348
    %378 = vmatprep.subr.mxu0 0.0
    %379 = vmatpush1.msra.mxu0 %v349
    %380 = vmatprep.subr.mxu0 0.0
    %381 = vmatpush1.msra.mxu0 %v350
    %382 = vmatprep.subr.mxu0 0.0
    %383 = vmatpush1.msra.mxu0 %v351
    %384 = vmatprep.subr.mxu0 0.0
    %385 = vmatpush1.msra.mxu0 %v352
    %386 = vmatprep.subr.mxu0 0.0
    %387 = vmatpush1.msra.mxu0 %v353
    %388 = vmatprep.subr.mxu0 0.0
    %389 = vmatpush1.msra.mxu0 %v354
    %390 = vmatprep.subr.mxu0 0.0
    %391 = vmatpush1.msra.mxu0 %v355
    %392 = vmatprep.subr.mxu0 0.0
    %393 = vmatpush1.msra.mxu0 %v356
    %394 = vmatprep.subr.mxu0 0.0
    %395 = vmatpush1.msra.mxu0 %v357
    %396 = vmatprep.subr.mxu0 0.0
    %397 = vmatpush1.msra.mxu0 %v358
    %398 = vmatprep.subr.mxu0 0.0
    %399 = vmatpush1.msra.mxu0 0.0
    %400 = vmatprep.subr.mxu0 0.0
    %401 = vmatpush1.msra.mxu0 0.0
    %402 = vmatprep.subr.mxu0 0.0
    %403 = vmatpush1.msra.mxu0 0.0
    %404 = vmatprep.subr.mxu0 0.0
    %405 = vmatpush1.msra.mxu0 0.0
    %406 = vmatprep.subr.mxu0 0.0
    %407 = vmatpush1.msra.mxu0 0.0
    %408 = vmatprep.subr.mxu0 0.0
    %409 = vmatpush1.msra.mxu0 0.0
    %410 = vmatprep.subr.mxu0 0.0
    %411 = vmatpush1.msra.mxu0 0.0
    %412 = vmatprep.subr.mxu0 0.0
    %413 = vmatpush1.msra.mxu0 0.0
    %414 = vmatprep.subr.mxu0 0.0
    %415 = vmatpush1.msra.mxu0 0.0
    %416 = vmatprep.subr.mxu0 0.0
    %417 = vmatpush1.msra.mxu0 0.0
    %418 = vmatprep.subr.mxu0 0.0
    %419 = vmatpush1.msra.mxu0 0.0
    %420 = vmatprep.subr.mxu0 0.0
    %421 = vmatpush1.msra.mxu0 0.0
    %422 = vmatprep.subr.mxu0 0.0
    %423 = vmatpush1.msra.mxu0 0.0
    %424 = vmatprep.subr.mxu0 0.0
    %425 = vmatpush1.msra.mxu0 0.0
    %426 = vmatprep.subr.mxu0 0.0
    %427 = vmatpush1.msra.mxu0 0.0
    %428 = vmatprep.subr.mxu0 0.0
    %429 = vmatpush1.msra.mxu0 0.0
    %430 = vmatprep.mubr.f32.mxu0 0.0
    %431 = vmatmul.mubr.f32.gmra.mrb[0].mxu0 %v341
    %v432 = vpop.f32.mrb[0].mxu0
    %v433 = vadd.f32 %v364, %v432
    %v434 = vpop.f32.mrb[0].mxu0
    %435 = vmatprep.mubr.f32.mxu0 0.0
    %436 = vmatmul.mubr.f32.gmra.mrb[0].mxu0 %v342
    %v437 = vpop.f32.mrb[0].mxu0
    %v438 = vadd.f32 %v364, %v437
    %v439 = vpop.f32.mrb[0].mxu0
    %440 = vdwg.mxu0
    %441 = vst [vmem:[#allocation10] sm:$0xff] %v433
    %442 = vst [vmem:[#allocation10 + $0x8] sm:$0xff] %v438
    // Predicated region
    $region46: #{net_forward_padded.1} parent=1 // pred_check
      _
    $region47: #{net_forward_padded.1} parent=1 // pred_check_branch
      %444 = sbr.rel (0) target = $region49
    $region48: #{net_forward_padded.1} parent=1 // pred_region
      %s446 = ssub.s32 256, 256
      %447 = vsyncadd [#allocation4], %s446
      %s448 = sshll.u32 [#allocation10], 4
      %s449 = int_to_ptr.vmem [resolvable:$true] %s448
      %454 = dma.vmem_to_hbm [thread:$0]  %s449, 256, %s7, [#allocation4], 128, 128, 8
    $region49: #{net_forward_padded.1} parent=1 // pred_fallthru
      _
    // Predicated region
    $region50: #{net_forward_padded.1} parent=1 // pred_check
      _
    $region51: #{net_forward_padded.1} parent=1 // pred_check_branch
      %456 = sbr.rel (0) target = $region53
    $region52: #{net_forward_padded.1} parent=1 // pred_region
      %457 = dma.done [#allocation4], 256
    $region53: #{net_forward_padded.1} parent=1 // pred_fallthru
      _
    %458 = vsyncpa [#allocation3], 1
    %459 = vsyncpa [#allocation6], 1
    %460 = vsyncpa [#allocation9], 1
    %461 = vsyncpa [#allocation4], 1

</llo_original>
